<compile_context>
chip_gen: v7x
topology: tpu7x:2x2x1
jax: 0.10.0
libtpu: 0.0.40
codegen_flags: <defaults>
</compile_context>

<pallas_src>
import functools

import jax
import jax.numpy as jnp
from jax.experimental import pallas as pl
from jax.experimental.pallas import tpu as pltpu

LANE = 128
SUBLANE = 8


def _round_up(a, b):
    return ((a + b - 1) // b) * b


def _row_align(dtype):
    """Row-tile alignment so sub-32-bit dtypes meet their (16/32,128) packing."""
    itemsize = jnp.dtype(dtype).itemsize
    return SUBLANE * max(1, 4 // itemsize)   # f32 -> 8, bf16 -> 16, int8/bool -> 32


def _suf_partial_sums_kernel(x_ref, t_ref, o_ref, *, delta, gamma, n_splits,
                             steps, need_row_mask, valid_rows_last):
    """Accumulates lane-parallel partial sums into the resident (4,8,128) slab.

    o_ref[0]: sum of focal-loss terms
    o_ref[1]: sum of targets t
    o_ref[2]: sum of sigmoid probabilities p
    o_ref[3]: sum of t * p
    """
    c = pl.program_id(0)      # split ("parallel" axis -> TC shard on v7x)
    i = pl.program_id(1)      # reduction step ("arbitrary" axis)

    @pl.when(i == 0)
    def _():
        o_ref[...] = jnp.zeros_like(o_ref)

    x = x_ref[...].astype(jnp.float32)   # logits
    t = t_ref[...].astype(jnp.float32)   # hard targets in {0, 1}

    # ---- shared transcendentals (4 EUP ops / element) ----
    e = jnp.exp(-jnp.abs(x))                               # EUP: exp
    bce = jnp.maximum(x, 0.0) - x * t + jnp.log1p(e)       # EUP: log1p
    inv = pl.reciprocal(1.0 + e, approx=True)              # EUP: vrcp (no Newton)
    p = jnp.where(x >= 0.0, inv, e * inv)                  # sigmoid(x)

    tp = t * p
    # 1 - p_t == 1 - (t*p + (1-t)*(1-p)) == t + p - 2*t*p  (exact for hard labels)
    one_m_pt = jnp.maximum(t + p - 2.0 * tp, 0.0)          # clamp guards approx-rcp
    at = (1.0 - delta) + (2.0 * delta - 1.0) * t
    fg = 1.0 - gamma                                        # static Python float
    if fg == 0.5:
        w = jnp.sqrt(one_m_pt)                              # EUP: sqrt (no pow)
    elif fg == 1.0:
        w = one_m_pt
    elif fg == 0.0:
        w = jnp.ones_like(one_m_pt)
    else:
        w = jnp.power(one_m_pt, fg)
    f_loss = at * w * bce

    def _tile_sum(v):
        # (tr, 128) -> (8, 128): pure VPU vreg adds, no cross-lane work.
        return jnp.sum(v.reshape(-1, SUBLANE, LANE), axis=0)

    def _accumulate(f_v, t_v, p_v, tp_v):
        o_ref[0] = o_ref[0] + _tile_sum(f_v)
        o_ref[1] = o_ref[1] + _tile_sum(t_v)
        o_ref[2] = o_ref[2] + _tile_sum(p_v)
        o_ref[3] = o_ref[3] + _tile_sum(tp_v)

    if need_row_mask:
        # Only the globally-last block is partial; every other step pays zero
        # masking cost.  The boundary block's padding bytes are garbage, so
        # mask with jnp.where (does NOT propagate NaN/Inf, unlike multiply).
        is_last = (c == n_splits - 1) & (i == steps - 1)

        @pl.when(jnp.logical_not(is_last))
        def _():
            _accumulate(f_loss, t, p, tp)

        @pl.when(is_last)
        def _():
            rows = x.shape[0]
            row_ids = jax.lax.broadcasted_iota(jnp.int32, (rows, LANE), 0)
            m = row_ids < valid_rows_last
            tm = jnp.where(m, t, 0.0)
            pm = jnp.where(m, p, 0.0)
            fm = jnp.where(m, f_loss, 0.0)
            _accumulate(fm, tm, pm, tm * pm)
    else:
        _accumulate(f_loss, t, p, tp)


def _partial_sums_jax(x, t, delta, gamma):
    """Pure-JAX partial sums for the tiny (<~1K element) non-kernel tail."""
    x = x.astype(jnp.float32)
    t = t.astype(jnp.float32)
    e = jnp.exp(-jnp.abs(x))
    bce = jnp.maximum(x, 0.0) - x * t + jnp.log1p(e)
    p = jnp.where(x >= 0.0, 1.0 / (1.0 + e), e / (1.0 + e))
    tp = t * p
    one_m_pt = jnp.maximum(t + p - 2.0 * tp, 0.0)
    at = (1.0 - delta) + (2.0 * delta - 1.0) * t
    f = at * jnp.power(one_m_pt, 1.0 - gamma) * bce
    return jnp.sum(f), jnp.sum(t), jnp.sum(p), jnp.sum(tp)


def symmetric_unified_focal_loss(y_pred, y_true, *, delta=0.6, gamma=0.5,
                                 smooth=1e-6, tile_rows=4096):
    """Forward pass of SymmetricUnifiedFocalLoss. Returns a scalar (f32).

    delta/gamma must be static Python floats (specializes the pow path).
    tile_rows=4096 fits all chips' default scoped VMEM; try 8192 on v7x.
    """
    delta = float(delta)
    gamma = float(gamma)

    n = y_pred.size
    x_flat = y_pred.reshape(-1)
    t_flat = y_true.reshape(-1)

    row_align = max(_row_align(y_pred.dtype), _row_align(y_true.dtype))
    tile_rows = max(row_align, _round_up(int(tile_rows), row_align))

    rows_full = n // LANE            # full 128-wide rows
    N_SPLITS = 2                     # v7x has 2 TensorCores

    focal_sum = jnp.float32(0.0)
    sum_t = jnp.float32(0.0)
    sum_p = jnp.float32(0.0)
    sum_tp = jnp.float32(0.0)
    n_tail_start = 0

    if rows_full >= row_align:
        # ---- choose the row tile; aim for an even block count so the grid can
        # be split 2-way ("parallel") across TensorCores on v7x.
        max_tr = (rows_full // row_align) * row_align     # aligned, <= rows_full
        if rows_full >= 2 * row_align:
            blocks = max(2, 2 * pl.cdiv(pl.cdiv(rows_full, tile_rows), 2))
            tr = _round_up(pl.cdiv(rows_full, blocks), row_align)
            tr = min(tr, max_tr, tile_rows)
        else:
            tr = min(max_tr, tile_rows)
        total_blocks = pl.cdiv(rows_full, tr)
        if total_blocks % N_SPLITS == 0:
            n_splits, steps = N_SPLITS, total_blocks // N_SPLITS
        else:
            n_splits, steps = 1, total_blocks
        need_row_mask = (rows_full % tr) != 0
        valid_rows_last = rows_full - (total_blocks - 1) * tr

        n_main = rows_full * LANE
        # No jnp.pad: the prefix slice is a no-op when n is a multiple of 128
        # (the common NCHW segmentation case).
        # TODO(synk): a manual-DMA path could make the lane-ragged prefix
        # zero-copy too; here it costs at most one prefix copy.
        x2 = x_flat[:n_main].reshape(rows_full, LANE)
        t2 = t_flat[:n_main].reshape(rows_full, LANE)
        n_tail_start = n_main

        kernel = functools.partial(
            _suf_partial_sums_kernel, delta=delta, gamma=gamma,
            n_splits=n_splits, steps=steps, need_row_mask=need_row_mask,
            valid_rows_last=valid_rows_last)

        cost = pl.CostEstimate(
            flops=22 * n_main,
            transcendentals=4 * n_main,
            bytes_accessed=(x2.size * x2.dtype.itemsize
                            + t2.size * t2.dtype.itemsize
                            + n_splits * 4 * SUBLANE * LANE * 4),
        )

        acc = pl.pallas_call(
            kernel,
            out_shape=jax.ShapeDtypeStruct((4 * n_splits, SUBLANE, LANE),
                                           jnp.float32),
            grid_spec=pltpu.PrefetchScalarGridSpec(
                num_scalar_prefetch=0,
                grid=(n_splits, steps),
                in_specs=[
                    pl.BlockSpec((tr, LANE), lambda c, i: (c * steps + i, 0)),
                    pl.BlockSpec((tr, LANE), lambda c, i: (c * steps + i, 0)),
                ],
                out_specs=pl.BlockSpec((4, SUBLANE, LANE),
                                       lambda c, i: (c, 0, 0)),
            ),
            compiler_params=pltpu.CompilerParams(
                dimension_semantics=("parallel", "arbitrary")),
            cost_estimate=cost,
        )(x2, t2)

        sums = jnp.sum(acc.reshape(n_splits, 4, SUBLANE, LANE), axis=(0, 2, 3))
        focal_sum, sum_t, sum_p, sum_tp = sums[0], sums[1], sums[2], sums[3]

    if n_tail_start < n:
        # <128-element lane tail (or the whole input if it is tiny): plain JAX.
        fs, st, sp, stp = _partial_sums_jax(
            x_flat[n_tail_start:], t_flat[n_tail_start:], delta, gamma)
        focal_sum = focal_sum + fs
        sum_t = sum_t + st
        sum_p = sum_p + sp
        sum_tp = sum_tp + stp

    # ---- tiny scalar glue ----
    tp = sum_tp
    fn = sum_t - sum_tp
    fp = sum_p - sum_tp

    focal_loss = focal_sum / jnp.float32(n)             # BinaryFocalLoss 'mean'
    tversky_index = (tp + smooth) / (tp + delta * fn + (1.0 - delta) * fp + smooth)
    focal_tversky_loss = jnp.power(jnp.maximum(1.0 - tversky_index, 0.0), gamma)
    return focal_loss + focal_tversky_loss


def _reference_loss(y_pred, y_true, *, delta=0.6, gamma=0.5, smooth=1e-6):
    """Pure-JAX reference mirroring the PyTorch module."""
    x = y_pred.astype(jnp.float32)
    t = y_true.astype(jnp.float32)
    bce = jnp.maximum(x, 0.0) - x * t + jnp.log1p(jnp.exp(-jnp.abs(x)))
    p_t = jnp.exp(-bce)
    at = delta * t + (1.0 - delta) * (1.0 - t)
    focal = jnp.mean(at * jnp.power(1.0 - p_t, 1.0 - gamma) * bce)

    p = jax.nn.sigmoid(x).reshape(-1)
    tf = t.reshape(-1)
    tp = jnp.sum(tf * p)
    fn = jnp.sum(tf * (1.0 - p))
    fp = jnp.sum((1.0 - tf) * p)
    ti = (tp + smooth) / (tp + delta * fn + (1.0 - delta) * fp + smooth)
    return focal + jnp.power(1.0 - ti, gamma)


if __name__ == "__main__":
    key = jax.random.PRNGKey(0)
    k1, k2, k3, k4 = jax.random.split(key, 4)

    # Tolerance note: pl.reciprocal(approx=True) perturbs sigmoid by ~1e-3-level
    # relative error (flagged in the perf review); 5e-3 still catches real bugs.
    RTOL = ATOL = 5e-3

    # Test 1: aligned NCHW f32 logits / {0,1} masks -> 2-split grid, no masking.
    shape1 = (2, 4, 16, 16)
    yp1 = jax.random.normal(k1, shape1, dtype=jnp.float32) * 2.0
    yt1 = (jax.random.uniform(k2, shape1) > 0.5).astype(jnp.float32)
    out1 = jax.block_until_ready(symmetric_unified_focal_loss(yp1, yt1))
    ref1 = jax.block_until_ready(_reference_loss(yp1, yt1))
    assert jnp.isfinite(out1), "non-finite loss (test 1)"
    assert jnp.allclose(out1, ref1, rtol=RTOL, atol=ATOL), (out1, ref1)

    # Test 2: ragged bf16 inputs -> boundary-block row mask + <128-elem glue tail.
    shape2 = (2, 3, 31, 31)
    yp2 = (jax.random.normal(k3, shape2, dtype=jnp.float32) * 2.0).astype(jnp.bfloat16)
    yt2 = (jax.random.uniform(k4, shape2) > 0.5).astype(jnp.bfloat16)
    out2 = jax.block_until_ready(symmetric_unified_focal_loss(yp2, yt2))
    ref2 = jax.block_until_ready(_reference_loss(yp2, yt2))
    assert jnp.isfinite(out2), "non-finite loss (test 2)"
    assert jnp.allclose(out2, ref2, rtol=RTOL, atol=ATOL), (out2, ref2)

    # Test 3: multi-step accumulation along the "arbitrary" reduction axis.
    shape3 = (1, 1, 128, 128)
    yp3 = jax.random.normal(k1, shape3, dtype=jnp.float32)
    yt3 = (jax.random.uniform(k2, shape3) > 0.5).astype(jnp.float32)
    out3 = jax.block_until_ready(symmetric_unified_focal_loss(yp3, yt3, tile_rows=8))
    ref3 = jax.block_until_ready(_reference_loss(yp3, yt3))
    assert jnp.isfinite(out3), "non-finite loss (test 3)"
    assert jnp.allclose(out3, ref3, rtol=RTOL, atol=ATOL), (out3, ref3)

    print("KERNEL_OK")
</pallas_src>

<mosaic_0001>
module attributes {stable_mosaic.version = 11 : i64} {
  func.func @_suf_partial_sums_kernel(%arg0: i32, %arg1: i32, %arg2: memref<8x128xf32, #tpu.memory_space<vmem>>, %arg3: memref<8x128xf32, #tpu.memory_space<vmem>>, %arg4: memref<4x8x128xf32, #tpu.memory_space<vmem>>) attributes {dimension_semantics = [#tpu.dimension_semantics<parallel>, #tpu.dimension_semantics<arbitrary>], iteration_bounds = array<i64: 2, 1>, scalar_prefetch = 0 : i64, scratch_operands = 0 : i64, tpu.core_type = #tpu.core_type<tc>, window_params = [{transform_indices = @transform_0, window_bounds = array<i64: 8, 128>}, {transform_indices = @transform_1, window_bounds = array<i64: 8, 128>}, {transform_indices = @transform_2, window_bounds = array<i64: 4, 8, 128>}]} {
    %c0_i32 = arith.constant 0 : i32
    %0 = arith.cmpi eq, %arg1, %c0_i32 : i32
    %1 = arith.extui %0 : i1 to i32
    %c0_i32_0 = arith.constant 0 : i32
    %2 = arith.cmpi ne, %1, %c0_i32_0 : i32
    scf.if %2 {
      %cst_36 = arith.constant 0.000000e+00 : f32
      %68 = vector.broadcast %cst_36 : f32 to vector<4x8x128xf32>
      %c0_37 = arith.constant 0 : index
      %c0_38 = arith.constant 0 : index
      %c0_39 = arith.constant 0 : index
      %69 = vector.load %arg4[%c0_37, %c0_38, %c0_39] : memref<4x8x128xf32, #tpu.memory_space<vmem>>, vector<4x8x128xf32>
      tpu.vector_store %arg4[%c0_37, %c0_38, %c0_39], %68 {strides = array<i32>} : memref<4x8x128xf32, #tpu.memory_space<vmem>>, vector<4x8x128xf32>,
    } else {
    }
    %c0 = arith.constant 0 : index
    %c0_1 = arith.constant 0 : index
    %3 = vector.load %arg2[%c0, %c0_1] : memref<8x128xf32, #tpu.memory_space<vmem>>, vector<8x128xf32>
    %c0_2 = arith.constant 0 : index
    %c0_3 = arith.constant 0 : index
    %4 = vector.load %arg3[%c0_2, %c0_3] : memref<8x128xf32, #tpu.memory_space<vmem>>, vector<8x128xf32>
    %5 = math.absf %3 : vector<8x128xf32>
    %cst = arith.constant 0.000000e+00 : f32
    %6 = vector.broadcast %cst : f32 to vector<8x128xf32>
    %7 = arith.subf %6, %5 : vector<8x128xf32>
    %8 = math.exp %7 : vector<8x128xf32>
    %cst_4 = arith.constant 0.000000e+00 : f32
    %9 = vector.broadcast %cst_4 : f32 to vector<8x128xf32>
    %10 = arith.maximumf %3, %9 : vector<8x128xf32>
    %11 = arith.mulf %3, %4 : vector<8x128xf32>
    %12 = arith.subf %10, %11 : vector<8x128xf32>
    %13 = math.log1p %8 : vector<8x128xf32>
    %14 = arith.addf %12, %13 : vector<8x128xf32>
    %cst_5 = arith.constant 1.000000e+00 : f32
    %15 = vector.broadcast %cst_5 : f32 to vector<8x128xf32>
    %16 = arith.addf %15, %8 : vector<8x128xf32>
    %17 = tpu.reciprocal %16 {approx = true} : vector<8x128xf32> -> vector<8x128xf32>
    %cst_6 = arith.constant 0.000000e+00 : f32
    %18 = vector.broadcast %cst_6 : f32 to vector<8x128xf32>
    %19 = arith.cmpf oge, %3, %18 : vector<8x128xf32>
    %20 = arith.mulf %8, %17 : vector<8x128xf32>
    %21 = arith.select %19, %17, %20 : vector<8x128xi1>, vector<8x128xf32>
    %22 = arith.mulf %4, %21 : vector<8x128xf32>
    %23 = arith.addf %4, %21 : vector<8x128xf32>
    %cst_7 = arith.constant 2.000000e+00 : f32
    %24 = vector.broadcast %cst_7 : f32 to vector<8x128xf32>
    %25 = arith.mulf %24, %22 : vector<8x128xf32>
    %26 = arith.subf %23, %25 : vector<8x128xf32>
    %cst_8 = arith.constant 0.000000e+00 : f32
    %27 = vector.broadcast %cst_8 : f32 to vector<8x128xf32>
    %28 = arith.maximumf %26, %27 : vector<8x128xf32>
    %cst_9 = arith.constant 2.000000e-01 : f32
    %29 = vector.broadcast %cst_9 : f32 to vector<8x128xf32>
    %30 = arith.mulf %29, %4 : vector<8x128xf32>
    %cst_10 = arith.constant 4.000000e-01 : f32
    %31 = vector.broadcast %cst_10 : f32 to vector<8x128xf32>
    %32 = arith.addf %31, %30 : vector<8x128xf32>
    %33 = math.sqrt %28 : vector<8x128xf32>
    %34 = arith.mulf %32, %33 : vector<8x128xf32>
    %35 = arith.mulf %34, %14 : vector<8x128xf32>
    %c0_11 = arith.constant 0 : index
    %c0_12 = arith.constant 0 : index
    %c0_13 = arith.constant 0 : index
    %36 = vector.load %arg4[%c0_11, %c0_12, %c0_13] : memref<4x8x128xf32, #tpu.memory_space<vmem>>, vector<1x8x128xf32>
    %37 = vector.shape_cast %36 : vector<1x8x128xf32> to vector<8x128xf32>
    %38 = vector.shape_cast %35 : vector<8x128xf32> to vector<1x8x128xf32>
    %cst_14 = arith.constant dense<0.000000e+00> : vector<8x128xf32>
    %39 = vector.multi_reduction <add>, %38, %cst_14 [0] : vector<1x8x128xf32> to vector<8x128xf32>
    %40 = arith.addf %37, %39 : vector<8x128xf32>
    %c0_15 = arith.constant 0 : index
    %c0_16 = arith.constant 0 : index
    %c0_17 = arith.constant 0 : index
    %41 = vector.load %arg4[%c0_15, %c0_16, %c0_17] : memref<4x8x128xf32, #tpu.memory_space<vmem>>, vector<1x8x128xf32>
    %42 = vector.shape_cast %41 : vector<1x8x128xf32> to vector<8x128xf32>
    %43 = vector.shape_cast %40 : vector<8x128xf32> to vector<1x8x128xf32>
    tpu.vector_store %arg4[%c0_15, %c0_16, %c0_17], %43 {strides = array<i32>} : memref<4x8x128xf32, #tpu.memory_space<vmem>>, vector<1x8x128xf32>,
    %c1 = arith.constant 1 : index
    %c0_18 = arith.constant 0 : index
    %c0_19 = arith.constant 0 : index
    %44 = vector.load %arg4[%c1, %c0_18, %c0_19] : memref<4x8x128xf32, #tpu.memory_space<vmem>>, vector<1x8x128xf32>
    %45 = vector.shape_cast %44 : vector<1x8x128xf32> to vector<8x128xf32>
    %46 = vector.shape_cast %4 : vector<8x128xf32> to vector<1x8x128xf32>
    %cst_20 = arith.constant dense<0.000000e+00> : vector<8x128xf32>
    %47 = vector.multi_reduction <add>, %46, %cst_20 [0] : vector<1x8x128xf32> to vector<8x128xf32>
    %48 = arith.addf %45, %47 : vector<8x128xf32>
    %c1_21 = arith.constant 1 : index
    %c0_22 = arith.constant 0 : index
    %c0_23 = arith.constant 0 : index
    %49 = vector.load %arg4[%c1_21, %c0_22, %c0_23] : memref<4x8x128xf32, #tpu.memory_space<vmem>>, vector<1x8x128xf32>
    %50 = vector.shape_cast %49 : vector<1x8x128xf32> to vector<8x128xf32>
    %51 = vector.shape_cast %48 : vector<8x128xf32> to vector<1x8x128xf32>
    tpu.vector_store %arg4[%c1_21, %c0_22, %c0_23], %51 {strides = array<i32>} : memref<4x8x128xf32, #tpu.memory_space<vmem>>, vector<1x8x128xf32>,
    %c2 = arith.constant 2 : index
    %c0_24 = arith.constant 0 : index
    %c0_25 = arith.constant 0 : index
    %52 = vector.load %arg4[%c2, %c0_24, %c0_25] : memref<4x8x128xf32, #tpu.memory_space<vmem>>, vector<1x8x128xf32>
    %53 = vector.shape_cast %52 : vector<1x8x128xf32> to vector<8x128xf32>
    %54 = vector.shape_cast %21 : vector<8x128xf32> to vector<1x8x128xf32>
    %cst_26 = arith.constant dense<0.000000e+00> : vector<8x128xf32>
    %55 = vector.multi_reduction <add>, %54, %cst_26 [0] : vector<1x8x128xf32> to vector<8x128xf32>
    %56 = arith.addf %53, %55 : vector<8x128xf32>
    %c2_27 = arith.constant 2 : index
    %c0_28 = arith.constant 0 : index
    %c0_29 = arith.constant 0 : index
    %57 = vector.load %arg4[%c2_27, %c0_28, %c0_29] : memref<4x8x128xf32, #tpu.memory_space<vmem>>, vector<1x8x128xf32>
    %58 = vector.shape_cast %57 : vector<1x8x128xf32> to vector<8x128xf32>
    %59 = vector.shape_cast %56 : vector<8x128xf32> to vector<1x8x128xf32>
    tpu.vector_store %arg4[%c2_27, %c0_28, %c0_29], %59 {strides = array<i32>} : memref<4x8x128xf32, #tpu.memory_space<vmem>>, vector<1x8x128xf32>,
    %c3 = arith.constant 3 : index
    %c0_30 = arith.constant 0 : index
    %c0_31 = arith.constant 0 : index
    %60 = vector.load %arg4[%c3, %c0_30, %c0_31] : memref<4x8x128xf32, #tpu.memory_space<vmem>>, vector<1x8x128xf32>
    %61 = vector.shape_cast %60 : vector<1x8x128xf32> to vector<8x128xf32>
    %62 = vector.shape_cast %22 : vector<8x128xf32> to vector<1x8x128xf32>
    %cst_32 = arith.constant dense<0.000000e+00> : vector<8x128xf32>
    %63 = vector.multi_reduction <add>, %62, %cst_32 [0] : vector<1x8x128xf32> to vector<8x128xf32>
    %64 = arith.addf %61, %63 : vector<8x128xf32>
    %c3_33 = arith.constant 3 : index
    %c0_34 = arith.constant 0 : index
    %c0_35 = arith.constant 0 : index
    %65 = vector.load %arg4[%c3_33, %c0_34, %c0_35] : memref<4x8x128xf32, #tpu.memory_space<vmem>>, vector<1x8x128xf32>
    %66 = vector.shape_cast %65 : vector<1x8x128xf32> to vector<8x128xf32>
    %67 = vector.shape_cast %64 : vector<8x128xf32> to vector<1x8x128xf32>
    tpu.vector_store %arg4[%c3_33, %c0_34, %c0_35], %67 {strides = array<i32>} : memref<4x8x128xf32, #tpu.memory_space<vmem>>, vector<1x8x128xf32>,
    return
  }
  func.func @transform_0(%arg0: i32, %arg1: i32) -> (i32, i32) {
    %c1_i32 = arith.constant 1 : i32
    %0 = arith.muli %arg0, %c1_i32 : i32
    %1 = arith.addi %0, %arg1 : i32
    %c0_i32 = arith.constant 0 : i32
    %c0_i32_0 = arith.constant 0 : i32
    return %1, %c0_i32 : i32, i32
  }
  func.func @transform_1(%arg0: i32, %arg1: i32) -> (i32, i32) {
    %c1_i32 = arith.constant 1 : i32
    %0 = arith.muli %arg0, %c1_i32 : i32
    %1 = arith.addi %0, %arg1 : i32
    %c0_i32 = arith.constant 0 : i32
    %c0_i32_0 = arith.constant 0 : i32
    return %1, %c0_i32 : i32, i32
  }
  func.func @transform_2(%arg0: i32, %arg1: i32) -> (i32, i32, i32) {
    %c0_i32 = arith.constant 0 : i32
    %c0_i32_0 = arith.constant 0 : i32
    %c0_i32_1 = arith.constant 0 : i32
    return %arg0, %c0_i32, %c0_i32_0 : i32, i32, i32
  }
}

</mosaic_0001>

<llo_original>
// kernel: tpu_custom_call.1
$region0: #{tpu_custom_call.1}
  #allocation0 [shape = 'u32[]', space=smem, size = 0x4, offset = 0x4, fixed_abs, tag = 'smem constant byte address 0x4 - core index']
  #allocation1 [shape = 'u32[144,128]{1,0:T(1,128)}', space=vmem, size = 0x12000, scoped, tag = 'internal scratch']
  %s0 = inlined_call_operand.hbm [shape: f32[16,128], index: 0, kind: input, shape index: {}]
  %s1 = inlined_call_operand.hbm [shape: f32[16,128], index: 1, kind: input, shape index: {}]
  %s2 = inlined_call_operand.hbm [shape: f32[8,8,128], index: 2, kind: output, shape index: {}]
  %s3 = sld [smem:[#allocation0]]
  $region53: #{tpu_custom_call.1} parent=0
    _
  %s5 = ssub.s32 1, %s3
  %s6 = scalar_select 0, %s5, %s3
  $region1: #{tpu_custom_call.1} parent=0
    #allocation2 [shape = 'u8[8192]{0}', space=vmem, size = 0x2000, scoped, tag = 'input window, operand 0']
    #allocation3 [shape = 's32[2]{0}', space=sflag, size = 0x8, scoped, tag = 'scoped memory for tpu_custom_call.1']
    #allocation4 [shape = 's32[2]{0}', space=sflag, size = 0x8, scoped, tag = 'scoped memory for tpu_custom_call.1']
    #allocation5 [shape = 'u8[8192]{0}', space=vmem, size = 0x2000, scoped, tag = 'input window, operand 1']
    #allocation6 [shape = 's32[2]{0}', space=sflag, size = 0x8, scoped, tag = 'scoped memory for tpu_custom_call.1']
    #allocation7 [shape = 'u8[32768]{0}', space=vmem, size = 0x8000, scoped, tag = 'output window, operand 0']
    %7 = vsyncpa [#allocation3], 0
    %s8 = scalar_lea.sflag [#allocation3], 1
    %9 = vsyncpa %s8, 0
    %10 = vsyncpa [#allocation6], 0
    %s11 = scalar_lea.sflag [#allocation6], 1
    %12 = vsyncpa %s11, 0
    %13 = vsyncpa [#allocation4], 0
    %s14 = scalar_lea.sflag [#allocation4], 1
    %15 = vsyncpa %s14, 0
    loop: start=0, step=1, limit=4
    $region2: #{tpu_custom_call.1} parent=1 // loop_pre_header
      _
    $region3: #{tpu_custom_call.1} parent=1 // loop_header
      %s17 = sphi 0, %s21
      %p18 = scmp.ge.s32.totalorder %s17, 4
      %s24 = sphi 0, %s36
      %s25 = sphi 0, %s32
      %s26 = sphi 0, %s24
      %s27 = sphi 0, %s25
      %s28 = sphi 0, %s26
      %s29 = sphi 0, %s27
      %s41 = sphi 0, %s43
      %s44 = sphi 0, %s41
      %s45 = sphi 0, %s44
      %s61 = sphi 0, %s45
      %s69 = sphi 0, %s71
      %s72 = sphi 0, %s69
      %s73 = sphi 0, %s72
      %s89 = sphi 0, %s73
      %s95 = sphi 0, %s97
      %s98 = sphi 0, %s95
      %s99 = sphi 0, %s98
      %s115 = sphi 0, %s99
    $region4: #{tpu_custom_call.1} parent=1 // loop_header_branch
      %20 = sbr.rel (%p18) target = $region8
    $region5: #{tpu_custom_call.1} parent=1 // loop_body
      %s22 = ssub.s32 %s17, 1
      %s23 = ssub.s32 %s17, 2
      %s30 = sadd.s32 1, %s25
      %p31 = scmp.ge.s32.totalorder %s30, 1
      %s32 = scalar_select %p31, 0, %s30
      %s33 = sadd.s32 1, %s24
      %s34 = scalar_select %p31, %s33, %s24
      %p35 = scmp.ge.s32.totalorder %s34, 2
      %s36 = scalar_select %p35, 0, %s34
      %s37 = sadd.s32 %s24, %s25
      %s38 = sadd.s32 %s36, %s32
      %s39 = ssub.s32 %s37, %s38
      %p40 = scmp.eq.s32.totalorder %s39, 0
      %s42 = sadd.s32 %s41, 1
      %s43 = scalar_select %p40, %s41, %s42
      %p46 = pneg %p40
      %p47 = scmp.eq.s32.totalorder %s17, 1
      %p48 = por %p46, %p47
      %p49 = scmp.ne.s32.totalorder %s41, %s44
      %p50 = scmp.eq.s32.totalorder %s17, 0
      %p51 = por %p49, %p50
      %p52 = scmp.ne.s32.totalorder %s41, %s44
      %p53 = scmp.eq.s32.totalorder %s22, 1
      %p54 = por %p52, %p53
      %p55 = scmp.ne.s32.totalorder %s44, %s45
      %p56 = scmp.eq.s32.totalorder %s22, 0
      %p57 = por %p55, %p56
      %p58 = scmp.ne.s32.totalorder %s44, %s45
      %p59 = scmp.eq.s32.totalorder %s23, 1
      %p60 = por %p58, %p59
      %p62 = scmp.ne.s32.totalorder %s45, %s61
      %p63 = scmp.eq.s32.totalorder %s23, 0
      %p64 = por %p62, %p63
      %s65 = sadd.s32 %s24, %s25
      %s66 = sadd.s32 %s36, %s32
      %s67 = ssub.s32 %s65, %s66
      %p68 = scmp.eq.s32.totalorder %s67, 0
      %s70 = sadd.s32 %s69, 1
      %s71 = scalar_select %p68, %s69, %s70
      %p74 = pneg %p68
      %p75 = scmp.eq.s32.totalorder %s17, 1
      %p76 = por %p74, %p75
      %p77 = scmp.ne.s32.totalorder %s69, %s72
      %p78 = scmp.eq.s32.totalorder %s17, 0
      %p79 = por %p77, %p78
      %p80 = scmp.ne.s32.totalorder %s69, %s72
      %p81 = scmp.eq.s32.totalorder %s22, 1
      %p82 = por %p80, %p81
      %p83 = scmp.ne.s32.totalorder %s72, %s73
      %p84 = scmp.eq.s32.totalorder %s22, 0
      %p85 = por %p83, %p84
      %p86 = scmp.ne.s32.totalorder %s72, %s73
      %p87 = scmp.eq.s32.totalorder %s23, 1
      %p88 = por %p86, %p87
      %p90 = scmp.ne.s32.totalorder %s73, %s89
      %p91 = scmp.eq.s32.totalorder %s23, 0
      %p92 = por %p90, %p91
      %s93 = ssub.s32 %s24, %s36
      %p94 = scmp.eq.s32.totalorder %s93, 0
      %s96 = sadd.s32 %s95, 1
      %s97 = scalar_select %p94, %s95, %s96
      %p100 = pneg %p94
      %p101 = scmp.eq.s32.totalorder %s17, 1
      %p102 = por %p100, %p101
      %p103 = scmp.ne.s32.totalorder %s95, %s98
      %p104 = scmp.eq.s32.totalorder %s17, 0
      %p105 = por %p103, %p104
      %p106 = scmp.ne.s32.totalorder %s95, %s98
      %p107 = scmp.eq.s32.totalorder %s22, 1
      %p108 = por %p106, %p107
      %p109 = scmp.ne.s32.totalorder %s98, %s99
      %p110 = scmp.eq.s32.totalorder %s22, 0
      %p111 = por %p109, %p110
      %p112 = scmp.ne.s32.totalorder %s98, %s99
      %p113 = scmp.eq.s32.totalorder %s23, 1
      %p114 = por %p112, %p113
      %p116 = scmp.ne.s32.totalorder %s99, %s115
      %p117 = scmp.eq.s32.totalorder %s23, 0
      %p118 = por %p116, %p117
      %p119 = scmp.le.s32.totalorder 1, %s17
      %p120 = scmp.lt.s32.totalorder %s17, 3
      %p121 = pnand %p119, %p120
      %p122 = pneg %p121
      // Predicated region
      $region9: #{tpu_custom_call.1} parent=5 // pred_check
        _
      $region10: #{tpu_custom_call.1} parent=5 // pred_check_branch
        %124 = sbr.rel (%p121) target = $region12
      $region11: #{tpu_custom_call.1} parent=5 // pred_region
        %s125 = ssub.s32 %s17, 1
      $region12: #{tpu_custom_call.1} parent=5 // pred_fallthru
        _
      %p126 = scmp.lt.s32.totalorder %s17, 2
      // Predicated region
      $region13: #{tpu_custom_call.1} parent=5 // pred_check
        %p127 = pneg %p126
      $region14: #{tpu_custom_call.1} parent=5 // pred_check_branch
        %129 = sbr.rel (%p127) target = $region16
      $region15: #{tpu_custom_call.1} parent=5 // pred_region
        // Predicated region
        $region17: #{tpu_custom_call.1} parent=15 // pred_check
          %p130 = pneg %p51
        $region18: #{tpu_custom_call.1} parent=15 // pred_check_branch
          %132 = sbr.rel (%p130) target = $region20
        $region19: #{tpu_custom_call.1} parent=15 // pred_region
          %s133 = sand.u32 %s41, 1
          %s134 = scalar_lea.sflag [#allocation3], %s133
          %s135 = sand.u32 %s41, 1
          %s136 = smul.addr %s135, 8
          %s137 = scalar_lea.vmem [#allocation2], %s136
          %s138 = sadd.s32 %s24, %s25
          %s140 = ssub.s32 128, 128
          %141 = vsyncadd %s134, %s140
          %s142 = smul.addr %s138, 128
          %s143 = scalar_lea.hbm %s0, %s142
          %s145 = sshll.u32 %s137, 4
          %s146 = int_to_ptr.vmem [resolvable:$true] %s145
          %148 = dma.hbm_to_vmem [thread:$0]  %s143, 128, %s146, %s134
        $region20: #{tpu_custom_call.1} parent=15 // pred_fallthru
          _
        // Predicated region
        $region21: #{tpu_custom_call.1} parent=15 // pred_check
          %p149 = pneg %p79
        $region22: #{tpu_custom_call.1} parent=15 // pred_check_branch
          %151 = sbr.rel (%p149) target = $region24
        $region23: #{tpu_custom_call.1} parent=15 // pred_region
          %s152 = sand.u32 %s69, 1
          %s153 = scalar_lea.sflag [#allocation6], %s152
          %s154 = sand.u32 %s69, 1
          %s155 = smul.addr %s154, 8
          %s156 = scalar_lea.vmem [#allocation5], %s155
          %s157 = sadd.s32 %s24, %s25
          %s159 = ssub.s32 128, 128
          %160 = vsyncadd %s153, %s159
          %s161 = smul.addr %s157, 128
          %s162 = scalar_lea.hbm %s1, %s161
          %s164 = sshll.u32 %s156, 4
          %s165 = int_to_ptr.vmem [resolvable:$true] %s164
          %167 = dma.hbm_to_vmem [thread:$0]  %s162, 128, %s165, %s153
        $region24: #{tpu_custom_call.1} parent=15 // pred_fallthru
          _
      $region16: #{tpu_custom_call.1} parent=5 // pred_fallthru
        _
      %p168 = scmp.le.s32.totalorder 1, %s17
      %p169 = scmp.lt.s32.totalorder %s17, 3
      %p170 = pnand %p168, %p169
      %p171 = pneg %p170
      // Predicated region
      $region25: #{tpu_custom_call.1} parent=5 // pred_check
        _
      $region26: #{tpu_custom_call.1} parent=5 // pred_check_branch
        %173 = sbr.rel (%p170) target = $region28
      $region27: #{tpu_custom_call.1} parent=5 // pred_region
        %s174 = ssub.s32 %s17, 1
        %s175 = sand.u32 %s44, 1
        %s176 = scalar_lea.sflag [#allocation3], %s175
        %s177 = sand.u32 %s44, 1
        %s178 = smul.addr %s177, 8
        %s179 = scalar_lea.vmem [#allocation2], %s178
        // Predicated region
        $region29: #{tpu_custom_call.1} parent=27 // pred_check
          %p180 = pneg %p57
        $region30: #{tpu_custom_call.1} parent=27 // pred_check_branch
          %182 = sbr.rel (%p180) target = $region32
        $region31: #{tpu_custom_call.1} parent=27 // pred_region
          %183 = dma.done %s176, 128
        $region32: #{tpu_custom_call.1} parent=27 // pred_fallthru
          _
        %s184 = sand.u32 %s72, 1
        %s185 = scalar_lea.sflag [#allocation6], %s184
        %s186 = sand.u32 %s72, 1
        %s187 = smul.addr %s186, 8
        %s188 = scalar_lea.vmem [#allocation5], %s187
        // Predicated region
        $region33: #{tpu_custom_call.1} parent=27 // pred_check
          %p189 = pneg %p85
        $region34: #{tpu_custom_call.1} parent=27 // pred_check_branch
          %191 = sbr.rel (%p189) target = $region36
        $region35: #{tpu_custom_call.1} parent=27 // pred_region
          %192 = dma.done %s185, 128
        $region36: #{tpu_custom_call.1} parent=27 // pred_fallthru
          _
        %s193 = sand.u32 %s44, 1
        %s194 = scalar_lea.sflag [#allocation3], %s193
        %s195 = sand.u32 %s44, 1
        %s196 = smul.addr %s195, 8
        %s197 = scalar_lea.vmem [#allocation2], %s196
        %p198 = pneg %p57
        %p199 = pneg %p54
        %s200 = sand.u32 %s72, 1
        %s201 = scalar_lea.sflag [#allocation6], %s200
        %s202 = sand.u32 %s72, 1
        %s203 = smul.addr %s202, 8
        %s204 = scalar_lea.vmem [#allocation5], %s203
        %p205 = pneg %p85
        %p206 = pneg %p82
        %p207 = pneg %p111
        %p208 = pneg %p108
        %s209 = sand.u32 %s98, 1
        %s210 = scalar_lea.sflag [#allocation4], %s209
        %s211 = sand.u32 %s98, 1
        %s212 = smul.addr %s211, 32
        %s213 = scalar_lea.vmem [#allocation7], %s212
        %s214 = sadd.s32 %s26, %s27
        %s215 = sadd.s32 %s26, %s27
        %s216 = smul.u32 4, %s26
        %p217 = scmp.eq.s32.totalorder %s27, 0
        // Predicated region
        $region37: #{tpu_custom_call.1} parent=27 // pred_check
          %p218 = pneg %p217
        $region38: #{tpu_custom_call.1} parent=27 // pred_check_branch
          %220 = sbr.rel (%p218) target = $region40
        $region39: #{tpu_custom_call.1} parent=27 // pred_region
          %221 = vst [vmem:[%s213] sm:$0xff] 0.0
          %222 = vst [vmem:[%s213 + $0x8] sm:$0xff] 0.0
          %223 = vst [vmem:[%s213 + $0x10] sm:$0xff] 0.0
          %224 = vst [vmem:[%s213 + $0x18] sm:$0xff] 0.0
        $region40: #{tpu_custom_call.1} parent=27 // pred_fallthru
          _
        %v225 = vld [vmem:[%s179] sm:$0xff]
        %v226 = vld [vmem:[%s188] sm:$0xff]
        %v227 = vand.u32 2147483647, %v225
        %v228 = vsub.f32 0.0, %v227
        %v229 = vmul.f32 %v228, 1.442695
        %v230 = vpow.pop %v229
        %v231 = vmax.f32 %v225, 0.0
        %v232 = vmul.f32 %v225, %v226
        %v233 = vsub.f32 %v231, %v232
        %v234 = vadd.f32 %v230, 1.0
        %v235 = vlog2.pop %v234
        %v236 = vmul.f32 %v235, 0.6931472
        %v237 = vmul.f32 -0.5, %v230
        %v238 = vadd.f32 %v237, 1.0
        %v239 = vmul.f32 %v238, %v230
        %v240 = vand.u32 2147483647, %v230
        %vm241 = vcmp.lt.f32.partialorder %v240, 0.0004427343
        %v242 = vsel %vm241, %v239, %v236
        %v243 = vadd.f32 %v233, %v242
        %v244 = vadd.f32 %v230, 1.0
        %v245 = vrcp.pop %v244
        %vm246 = vcmp.ge.f32.partialorder %v225, 0.0
        %v247 = vmul.f32 %v230, %v245
        %v248 = vsel %vm246, %v245, %v247
        %v249 = vmul.f32 %v226, %v248
        %v250 = vadd.f32 %v226, %v248
        %v251 = vmul.f32 %v249, 2.0
        %v252 = vsub.f32 %v250, %v251
        %v253 = vmax.f32 %v252, 0.0
        %v254 = vmul.f32 %v226, 0.2
        %v255 = vadd.f32 %v254, 0.4
        %v256 = vrsqrt.pop %v253
        %v257 = vmul.f32 %v253, %v256
        %vm258 = vcmp.eq.f32.partialorder %v253, inf
        %v259 = vsel %vm258, %v253, %v257
        %vm260 = vcmp.eq.f32.partialorder %v253, 0.0
        %v261 = vand.u32 %v253, 2147483648
        %v262 = vsel %vm260, %v261, %v259
        %v263 = vmul.f32 %v255, %v262
        %v264 = vmul.f32 %v263, %v243
        %v265 = vld [vmem:[%s213] sm:$0xff]
        %v266 = vadd.f32 %v264, 0.0
        %v267 = vadd.f32 %v265, %v266
        %268 = vst [vmem:[%s213] sm:$0xff] %v267
        %s269 = scalar_lea.vmem %s213, 8 [#allocation7]
        %v270 = vld [vmem:[%s269] sm:$0xff]
        %v271 = vadd.f32 %v226, 0.0
        %v272 = vadd.f32 %v270, %v271
        %273 = vst [vmem:[%s269] sm:$0xff] %v272
        %s274 = scalar_lea.vmem %s213, 16 [#allocation7]
        %v275 = vld [vmem:[%s274] sm:$0xff]
        %v276 = vadd.f32 %v248, 0.0
        %v277 = vadd.f32 %v275, %v276
        %278 = vst [vmem:[%s274] sm:$0xff] %v277
        %s279 = scalar_lea.vmem %s213, 24 [#allocation7]
        %v280 = vld [vmem:[%s279] sm:$0xff]
        %v281 = vadd.f32 %v249, 0.0
        %v282 = vadd.f32 %v280, %v281
        %283 = vst [vmem:[%s279] sm:$0xff] %v282
        %s284 = sand.u32 %s98, 1
        %s285 = scalar_lea.sflag [#allocation4], %s284
        %s286 = sand.u32 %s98, 1
        %s287 = smul.addr %s286, 32
        %s288 = scalar_lea.vmem [#allocation7], %s287
        // Predicated region
        $region41: #{tpu_custom_call.1} parent=27 // pred_check
          %p289 = pneg %p108
        $region42: #{tpu_custom_call.1} parent=27 // pred_check_branch
          %291 = sbr.rel (%p289) target = $region44
        $region43: #{tpu_custom_call.1} parent=27 // pred_region
          %s292 = smul.u32 4, %s26
          %s294 = ssub.s32 512, 512
          %295 = vsyncadd %s285, %s294
          %s296 = smul.addr %s292, 128
          %s297 = scalar_lea.hbm %s2, %s296
          %s298 = sshll.u32 %s288, 4
          %s299 = int_to_ptr.vmem [resolvable:$true] %s298
          %304 = dma.vmem_to_hbm [thread:$0]  %s299, 512, %s297, %s285, 128, 128, 8
        $region44: #{tpu_custom_call.1} parent=27 // pred_fallthru
          _
      $region28: #{tpu_custom_call.1} parent=5 // pred_fallthru
        _
      %p305 = scmp.le.s32.totalorder 2, %s17
      // Predicated region
      $region45: #{tpu_custom_call.1} parent=5 // pred_check
        %p306 = pneg %p305
      $region46: #{tpu_custom_call.1} parent=5 // pred_check_branch
        %308 = sbr.rel (%p306) target = $region48
      $region47: #{tpu_custom_call.1} parent=5 // pred_region
        %s309 = ssub.s32 %s17, 2
        // Predicated region
        $region49: #{tpu_custom_call.1} parent=47 // pred_check
          %p310 = pneg %p114
        $region50: #{tpu_custom_call.1} parent=47 // pred_check_branch
          %312 = sbr.rel (%p310) target = $region52
        $region51: #{tpu_custom_call.1} parent=47 // pred_region
          %s313 = sand.u32 %s99, 1
          %s314 = scalar_lea.sflag [#allocation4], %s313
          %s315 = sand.u32 %s99, 1
          %s316 = smul.addr %s315, 32
          %s317 = scalar_lea.vmem [#allocation7], %s316
          %318 = dma.done %s314, 512
        $region52: #{tpu_custom_call.1} parent=47 // pred_fallthru
          _
      $region48: #{tpu_custom_call.1} parent=5 // pred_fallthru
        _
    $region6: #{tpu_custom_call.1} parent=1 // loop_footer
      %s21 = sadd.s32 1, %s17
    $region7: #{tpu_custom_call.1} parent=1 // loop_footer_branch
      %16 = sbr.rel target = $region3
    $region8: #{tpu_custom_call.1} parent=1 // loop_exit
      _
    %319 = vsyncpa [#allocation3], 1
    %s320 = scalar_lea.sflag [#allocation3], 1
    %321 = vsyncpa %s320, 1
    %322 = vsyncpa [#allocation6], 1
    %s323 = scalar_lea.sflag [#allocation6], 1
    %324 = vsyncpa %s323, 1
    %325 = vsyncpa [#allocation4], 1
    %s326 = scalar_lea.sflag [#allocation4], 1
    %327 = vsyncpa %s326, 1

</llo_original>
